<compile_context>
chip_gen: v7x
topology: tpu7x:2x2x1
jax: 0.10.0
libtpu: 0.0.40
codegen_flags: <defaults>
</compile_context>

<pallas_src>
import functools

import jax
import jax.numpy as jnp
from jax.experimental import pallas as pl
from jax.experimental.pallas import tpu as pltpu

LN_EPS = 1e-5
LOG_STD_MIN = -20.0
LOG_STD_MAX = 2.0
MAX_BATCH_TILE = 2048   # rows per grid step (cap)
MIN_SPLIT_BATCH = 512   # batches >= this always get >= 2 grid steps (v7x 2xTC)


def _round_up(x, m):
    return ((x + m - 1) // m) * m


def _head_half(action_dim):
    """Lane width reserved for each head (mean / std) in the fused output."""
    assert action_dim <= 128, "action_dim must be <= 128 for the padded head"
    return 64 if action_dim <= 64 else 128


def _pick_batch_tile(batch):
    """Balanced batch tile: <= MAX_BATCH_TILE rows, >= 2 steps for big batches,
    rounded up to a sublane multiple (8) to keep padding waste minimal."""
    steps = -(-batch // MAX_BATCH_TILE)           # cdiv
    if batch >= MIN_SPLIT_BATCH:
        steps = max(steps, 2)
    steps = max(steps, 1)
    tb = _round_up(-(-batch // steps), 8)
    return tb


def _layernorm(x, gamma, beta):
    # One-pass stats: E[x], E[x^2]; biased variance (matches nn.LayerNorm).
    inv_n = 1.0 / x.shape[-1]
    s = jnp.sum(x, axis=-1, keepdims=True)
    ss = jnp.sum(x * x, axis=-1, keepdims=True)
    mu = s * inv_n
    var = jnp.maximum(ss * inv_n - mu * mu, 0.0)
    inv = jax.lax.rsqrt(var + LN_EPS)
    return (x - mu) * inv * gamma + beta


def actor_kernel(
    state_ref,
    w1_ref, b1_ref, g1_ref, be1_ref,
    w2_ref, b2_ref, g2_ref, be2_ref,
    wh_ref, bh_ref,
    out_ref,
    *, half,
):
    # ---- shared layer 1: Linear(state_dim, 256) + LayerNorm + ReLU ----
    x = state_ref[...].astype(jnp.bfloat16)
    h1 = jnp.dot(x, w1_ref[...], preferred_element_type=jnp.float32) + b1_ref[...]
    h1 = jnp.maximum(_layernorm(h1, g1_ref[...], be1_ref[...]), 0.0)

    # ---- shared layer 2: Linear(256, 128) + LayerNorm + ReLU ----
    h2 = jnp.dot(h1.astype(jnp.bfloat16), w2_ref[...],
                 preferred_element_type=jnp.float32) + b2_ref[...]
    h2 = jnp.maximum(_layernorm(h2, g2_ref[...], be2_ref[...]), 0.0)

    # ---- fused heads: one (128, 2*half) matmul + single bias add ----
    z = jnp.dot(h2.astype(jnp.bfloat16), wh_ref[...],
                preferred_element_type=jnp.float32) + bh_ref[...]

    # mean in lanes [0, half), std in lanes [half, 2*half); one unmasked store.
    lane = jax.lax.broadcasted_iota(jnp.int32, z.shape, dimension=1)
    mean_part = jnp.tanh(z)
    std_part = jnp.exp(jnp.clip(z, LOG_STD_MIN, LOG_STD_MAX))
    out_ref[...] = jnp.where(lane < half, mean_part, std_part).astype(out_ref.dtype)


@functools.partial(jax.jit, static_argnames=("action_dim",))
def actor_forward(state, packed, action_dim):
    """Returns (mean, std) of the action distribution."""
    batch, state_dim = state.shape
    h1d = packed["w1"].shape[1]      # 256
    h2d = packed["w2"].shape[1]      # 128
    half = packed["wh"].shape[1] // 2
    out_w = 2 * half                 # 128 for action_dim <= 64

    # Balanced batch tiling (multiple of 8, <= MAX_BATCH_TILE, >=2 steps big).
    tb = _pick_batch_tile(batch)
    b_pad = tb * (-(-batch // tb))
    x = state if b_pad == batch else jnp.pad(state, ((0, b_pad - batch), (0, 0)))

    # VMEM budget: double-buffered in/out tiles + f32 intermediates + weights.
    per_step = (
        tb * state_dim * 4
        + tb * out_w * 4
        + tb * (h1d + h2d + out_w) * 4
        + (state_dim * h1d + h1d * h2d + h2d * out_w) * 2
        + (3 * h1d + 3 * h2d + out_w) * 4
    )
    vmem_limit = int(min(48 << 20, max(16 << 20, 2 * per_step + (2 << 20))))

    const = lambda i: (0, 0)   # weights/biases stay VMEM-resident across the grid
    out = pl.pallas_call(
        functools.partial(actor_kernel, half=half),
        out_shape=jax.ShapeDtypeStruct((b_pad, out_w), jnp.float32),
        grid=(b_pad // tb,),
        in_specs=[
            pl.BlockSpec((tb, state_dim), lambda i: (i, 0)),
            pl.BlockSpec((state_dim, h1d), const),
            pl.BlockSpec((1, h1d), const),
            pl.BlockSpec((1, h1d), const),
            pl.BlockSpec((1, h1d), const),
            pl.BlockSpec((h1d, h2d), const),
            pl.BlockSpec((1, h2d), const),
            pl.BlockSpec((1, h2d), const),
            pl.BlockSpec((1, h2d), const),
            pl.BlockSpec((h2d, out_w), const),
            pl.BlockSpec((1, out_w), const),
        ],
        out_specs=pl.BlockSpec((tb, out_w), lambda i: (i, 0)),
        compiler_params=pltpu.CompilerParams(
            dimension_semantics=(pltpu.PARALLEL,),
            vmem_limit_bytes=vmem_limit,
        ),
    )(
        x,
        packed["w1"], packed["b1"], packed["g1"], packed["be1"],
        packed["w2"], packed["b2"], packed["g2"], packed["be2"],
        packed["wh"], packed["bh"],
    )

    mean = out[:batch, :action_dim]
    std = out[:batch, half:half + action_dim]
    return mean, std


def init_actor_params(key, state_dim, action_dim):
    """Deterministic init; Linear weights stored as (in, out), f32."""
    ks = jax.random.split(key, 8)

    def linear(kw, kb, fan_in, fan_out):
        bound = 1.0 / jnp.sqrt(fan_in)
        w = jax.random.uniform(kw, (fan_in, fan_out), jnp.float32, -bound, bound)
        b = jax.random.uniform(kb, (1, fan_out), jnp.float32, -bound, bound)
        return w, b

    w1, b1 = linear(ks[0], ks[1], state_dim, 256)
    w2, b2 = linear(ks[2], ks[3], 256, 128)
    wm, bm = linear(ks[4], ks[5], 128, action_dim)
    ws, bs = linear(ks[6], ks[7], 128, action_dim)

    return {
        "w1": w1, "b1": b1,
        "g1": jnp.ones((1, 256), jnp.float32), "be1": jnp.zeros((1, 256), jnp.float32),
        "w2": w2, "b2": b2,
        "g2": jnp.ones((1, 128), jnp.float32), "be2": jnp.zeros((1, 128), jnp.float32),
        "wm": wm, "bm": bm,
        "ws": ws, "bs": bs,
    }


def pack_actor_params(p, action_dim):
    """Kernel-format params: bf16 matmul weights, heads fused and lane-padded.

    Mean head -> lanes [0, half); std head -> lanes [half, 2*half).
    Padded columns carry zero weight/bias: tanh(0)=0, exp(clip(0))=1 (finite,
    sliced away by the wrapper)."""
    half = _head_half(action_dim)
    d = p["wm"].shape[0]  # 128
    wh = jnp.zeros((d, 2 * half), jnp.float32)
    wh = wh.at[:, :action_dim].set(p["wm"])
    wh = wh.at[:, half:half + action_dim].set(p["ws"])
    bh = jnp.zeros((1, 2 * half), jnp.float32)
    bh = bh.at[:, :action_dim].set(p["bm"])
    bh = bh.at[:, half:half + action_dim].set(p["bs"])
    return {
        "w1": p["w1"].astype(jnp.bfloat16), "b1": p["b1"],
        "g1": p["g1"], "be1": p["be1"],
        "w2": p["w2"].astype(jnp.bfloat16), "b2": p["b2"],
        "g2": p["g2"], "be2": p["be2"],
        "wh": wh.astype(jnp.bfloat16), "bh": bh,
    }


def _reference_forward(state, p):
    """Pure-JAX reference with the same bf16-matmul / f32-accumulate precision."""
    def mm(a, w):
        return jnp.dot(a.astype(jnp.bfloat16), w.astype(jnp.bfloat16),
                       preferred_element_type=jnp.float32)

    def ln(x, g, b):
        mu = jnp.mean(x, axis=-1, keepdims=True)
        var = jnp.mean((x - mu) ** 2, axis=-1, keepdims=True)
        return (x - mu) / jnp.sqrt(var + LN_EPS) * g + b

    h = jnp.maximum(ln(mm(state, p["w1"]) + p["b1"], p["g1"], p["be1"]), 0.0)
    h = jnp.maximum(ln(mm(h, p["w2"]) + p["b2"], p["g2"], p["be2"]), 0.0)
    mean = jnp.tanh(mm(h, p["wm"]) + p["bm"])
    log_std = jnp.clip(mm(h, p["ws"]) + p["bs"], LOG_STD_MIN, LOG_STD_MAX)
    return mean, jnp.exp(log_std)


if __name__ == "__main__":
    key = jax.random.PRNGKey(0)
    k_param, k_state, k_big = jax.random.split(key, 3)

    batch, state_dim, action_dim = 2, 32, 8
    params = init_actor_params(k_param, state_dim, action_dim)
    packed = pack_actor_params(params, action_dim)

    # --- small-batch path (single grid step) ---
    state = jax.random.normal(k_state, (batch, state_dim), jnp.float32)
    mean, std = actor_forward(state, packed, action_dim)
    jax.block_until_ready((mean, std))

    ref_mean, ref_std = _reference_forward(state, params)
    assert mean.shape == (batch, action_dim) and std.shape == (batch, action_dim)
    assert jnp.allclose(mean, ref_mean, atol=1e-2, rtol=1e-2)
    assert jnp.allclose(std, ref_std, atol=1e-2, rtol=1e-2)

    # --- larger ragged batch: exercises the balanced batch grid + padding ---
    big_b = 1037
    big_state = jax.random.normal(k_big, (big_b, state_dim), jnp.float32)
    big_mean, big_std = actor_forward(big_state, packed, action_dim)
    jax.block_until_ready((big_mean, big_std))
    big_ref_mean, big_ref_std = _reference_forward(big_state, params)
    assert big_mean.shape == (big_b, action_dim)
    assert jnp.allclose(big_mean, big_ref_mean, atol=1e-2, rtol=1e-2)
    assert jnp.allclose(big_std, big_ref_std, atol=1e-2, rtol=1e-2)

    print("KERNEL_OK")
</pallas_src>

<mosaic_0001>
module attributes {stable_mosaic.version = 11 : i64} {
  func.func @actor_kernel(%arg0: i32, %arg1: memref<8x32xf32, #tpu.memory_space<vmem>>, %arg2: memref<32x256xbf16, #tpu.memory_space<vmem>>, %arg3: memref<1x256xf32, #tpu.memory_space<vmem>>, %arg4: memref<1x256xf32, #tpu.memory_space<vmem>>, %arg5: memref<1x256xf32, #tpu.memory_space<vmem>>, %arg6: memref<256x128xbf16, #tpu.memory_space<vmem>>, %arg7: memref<1x128xf32, #tpu.memory_space<vmem>>, %arg8: memref<1x128xf32, #tpu.memory_space<vmem>>, %arg9: memref<1x128xf32, #tpu.memory_space<vmem>>, %arg10: memref<128x128xbf16, #tpu.memory_space<vmem>>, %arg11: memref<1x128xf32, #tpu.memory_space<vmem>>, %arg12: memref<8x128xf32, #tpu.memory_space<vmem>>) attributes {dimension_semantics = [#tpu.dimension_semantics<parallel>], iteration_bounds = array<i64: 1>, scalar_prefetch = 0 : i64, scratch_operands = 0 : i64, tpu.core_type = #tpu.core_type<tc>, window_params = [{transform_indices = @transform_0, window_bounds = array<i64: 8, 32>}, {pipeline_mode = #tpu.pipeline_mode<synchronous>, transform_indices = @transform_1, window_bounds = array<i64: 32, 256>}, {pipeline_mode = #tpu.pipeline_mode<synchronous>, transform_indices = @transform_2, window_bounds = array<i64: 1, 256>}, {pipeline_mode = #tpu.pipeline_mode<synchronous>, transform_indices = @transform_3, window_bounds = array<i64: 1, 256>}, {pipeline_mode = #tpu.pipeline_mode<synchronous>, transform_indices = @transform_4, window_bounds = array<i64: 1, 256>}, {pipeline_mode = #tpu.pipeline_mode<synchronous>, transform_indices = @transform_5, window_bounds = array<i64: 256, 128>}, {pipeline_mode = #tpu.pipeline_mode<synchronous>, transform_indices = @transform_6, window_bounds = array<i64: 1, 128>}, {pipeline_mode = #tpu.pipeline_mode<synchronous>, transform_indices = @transform_7, window_bounds = array<i64: 1, 128>}, {pipeline_mode = #tpu.pipeline_mode<synchronous>, transform_indices = @transform_8, window_bounds = array<i64: 1, 128>}, {pipeline_mode = #tpu.pipeline_mode<synchronous>, transform_indices = @transform_9, window_bounds = array<i64: 128, 128>}, {pipeline_mode = #tpu.pipeline_mode<synchronous>, transform_indices = @transform_10, window_bounds = array<i64: 1, 128>}, {transform_indices = @transform_11, window_bounds = array<i64: 8, 128>}]} {
    %c0 = arith.constant 0 : index
    %c0_0 = arith.constant 0 : index
    %0 = vector.load %arg1[%c0, %c0_0] : memref<8x32xf32, #tpu.memory_space<vmem>>, vector<8x32xf32>
    %1 = arith.truncf %0 : vector<8x32xf32> to vector<8x32xbf16>
    %c0_1 = arith.constant 0 : index
    %c0_2 = arith.constant 0 : index
    %2 = vector.load %arg2[%c0_1, %c0_2] : memref<32x256xbf16, #tpu.memory_space<vmem>>, vector<32x256xbf16>
    %cst = arith.constant dense<0.000000e+00> : vector<8x256xf32>
    %3 = tpu.matmul %1, %2, %cst {dimension_numbers = #tpu.dot_dimension_numbers<[1], [0], [0], [1], [0, 0, 1, 1], [], []>} : vector<8x32xbf16>, vector<32x256xbf16>, vector<8x256xf32> -> vector<8x256xf32>
    %c0_3 = arith.constant 0 : index
    %c0_4 = arith.constant 0 : index
    %4 = vector.load %arg3[%c0_3, %c0_4] : memref<1x256xf32, #tpu.memory_space<vmem>>, vector<1x256xf32>
    %5 = vector.broadcast %4 : vector<1x256xf32> to vector<8x256xf32>
    %6 = arith.addf %3, %5 : vector<8x256xf32>
    %c0_5 = arith.constant 0 : index
    %c0_6 = arith.constant 0 : index
    %7 = vector.load %arg4[%c0_5, %c0_6] : memref<1x256xf32, #tpu.memory_space<vmem>>, vector<1x256xf32>
    %c0_7 = arith.constant 0 : index
    %c0_8 = arith.constant 0 : index
    %8 = vector.load %arg5[%c0_7, %c0_8] : memref<1x256xf32, #tpu.memory_space<vmem>>, vector<1x256xf32>
    %cst_9 = arith.constant dense<0.000000e+00> : vector<8xf32>
    %9 = vector.multi_reduction <add>, %6, %cst_9 [1] : vector<8x256xf32> to vector<8xf32>
    %10 = vector.shape_cast %9 : vector<8xf32> to vector<8x1xf32>
    %11 = arith.mulf %6, %6 : vector<8x256xf32>
    %cst_10 = arith.constant dense<0.000000e+00> : vector<8xf32>
    %12 = vector.multi_reduction <add>, %11, %cst_10 [1] : vector<8x256xf32> to vector<8xf32>
    %13 = vector.shape_cast %12 : vector<8xf32> to vector<8x1xf32>
    %cst_11 = arith.constant 3.906250e-03 : f32
    %14 = vector.broadcast %cst_11 : f32 to vector<8x1xf32>
    %15 = arith.mulf %10, %14 : vector<8x1xf32>
    %cst_12 = arith.constant 3.906250e-03 : f32
    %16 = vector.broadcast %cst_12 : f32 to vector<8x1xf32>
    %17 = arith.mulf %13, %16 : vector<8x1xf32>
    %18 = arith.mulf %15, %15 : vector<8x1xf32>
    %19 = arith.subf %17, %18 : vector<8x1xf32>
    %cst_13 = arith.constant 0.000000e+00 : f32
    %20 = vector.broadcast %cst_13 : f32 to vector<8x1xf32>
    %21 = arith.maximumf %19, %20 : vector<8x1xf32>
    %cst_14 = arith.constant 9.99999974E-6 : f32
    %22 = vector.broadcast %cst_14 : f32 to vector<8x1xf32>
    %23 = arith.addf %21, %22 : vector<8x1xf32>
    %24 = math.rsqrt %23 : vector<8x1xf32>
    %25 = vector.broadcast %15 : vector<8x1xf32> to vector<8x256xf32>
    %26 = arith.subf %6, %25 : vector<8x256xf32>
    %27 = vector.broadcast %24 : vector<8x1xf32> to vector<8x256xf32>
    %28 = arith.mulf %26, %27 : vector<8x256xf32>
    %29 = vector.broadcast %7 : vector<1x256xf32> to vector<8x256xf32>
    %30 = arith.mulf %28, %29 : vector<8x256xf32>
    %31 = vector.broadcast %8 : vector<1x256xf32> to vector<8x256xf32>
    %32 = arith.addf %30, %31 : vector<8x256xf32>
    %cst_15 = arith.constant 0.000000e+00 : f32
    %33 = vector.broadcast %cst_15 : f32 to vector<8x256xf32>
    %34 = arith.maximumf %32, %33 : vector<8x256xf32>
    %35 = arith.truncf %34 : vector<8x256xf32> to vector<8x256xbf16>
    %c0_16 = arith.constant 0 : index
    %c0_17 = arith.constant 0 : index
    %36 = vector.load %arg6[%c0_16, %c0_17] : memref<256x128xbf16, #tpu.memory_space<vmem>>, vector<256x128xbf16>
    %cst_18 = arith.constant dense<0.000000e+00> : vector<8x128xf32>
    %37 = tpu.matmul %35, %36, %cst_18 {dimension_numbers = #tpu.dot_dimension_numbers<[1], [0], [0], [1], [0, 0, 1, 1], [], []>} : vector<8x256xbf16>, vector<256x128xbf16>, vector<8x128xf32> -> vector<8x128xf32>
    %c0_19 = arith.constant 0 : index
    %c0_20 = arith.constant 0 : index
    %38 = vector.load %arg7[%c0_19, %c0_20] : memref<1x128xf32, #tpu.memory_space<vmem>>, vector<1x128xf32>
    %39 = vector.broadcast %38 : vector<1x128xf32> to vector<8x128xf32>
    %40 = arith.addf %37, %39 : vector<8x128xf32>
    %c0_21 = arith.constant 0 : index
    %c0_22 = arith.constant 0 : index
    %41 = vector.load %arg8[%c0_21, %c0_22] : memref<1x128xf32, #tpu.memory_space<vmem>>, vector<1x128xf32>
    %c0_23 = arith.constant 0 : index
    %c0_24 = arith.constant 0 : index
    %42 = vector.load %arg9[%c0_23, %c0_24] : memref<1x128xf32, #tpu.memory_space<vmem>>, vector<1x128xf32>
    %cst_25 = arith.constant dense<0.000000e+00> : vector<8xf32>
    %43 = vector.multi_reduction <add>, %40, %cst_25 [1] : vector<8x128xf32> to vector<8xf32>
    %44 = vector.shape_cast %43 : vector<8xf32> to vector<8x1xf32>
    %45 = arith.mulf %40, %40 : vector<8x128xf32>
    %cst_26 = arith.constant dense<0.000000e+00> : vector<8xf32>
    %46 = vector.multi_reduction <add>, %45, %cst_26 [1] : vector<8x128xf32> to vector<8xf32>
    %47 = vector.shape_cast %46 : vector<8xf32> to vector<8x1xf32>
    %cst_27 = arith.constant 7.812500e-03 : f32
    %48 = vector.broadcast %cst_27 : f32 to vector<8x1xf32>
    %49 = arith.mulf %44, %48 : vector<8x1xf32>
    %cst_28 = arith.constant 7.812500e-03 : f32
    %50 = vector.broadcast %cst_28 : f32 to vector<8x1xf32>
    %51 = arith.mulf %47, %50 : vector<8x1xf32>
    %52 = arith.mulf %49, %49 : vector<8x1xf32>
    %53 = arith.subf %51, %52 : vector<8x1xf32>
    %cst_29 = arith.constant 0.000000e+00 : f32
    %54 = vector.broadcast %cst_29 : f32 to vector<8x1xf32>
    %55 = arith.maximumf %53, %54 : vector<8x1xf32>
    %cst_30 = arith.constant 9.99999974E-6 : f32
    %56 = vector.broadcast %cst_30 : f32 to vector<8x1xf32>
    %57 = arith.addf %55, %56 : vector<8x1xf32>
    %58 = math.rsqrt %57 : vector<8x1xf32>
    %59 = vector.broadcast %49 : vector<8x1xf32> to vector<8x128xf32>
    %60 = arith.subf %40, %59 : vector<8x128xf32>
    %61 = vector.broadcast %58 : vector<8x1xf32> to vector<8x128xf32>
    %62 = arith.mulf %60, %61 : vector<8x128xf32>
    %63 = vector.broadcast %41 : vector<1x128xf32> to vector<8x128xf32>
    %64 = arith.mulf %62, %63 : vector<8x128xf32>
    %65 = vector.broadcast %42 : vector<1x128xf32> to vector<8x128xf32>
    %66 = arith.addf %64, %65 : vector<8x128xf32>
    %cst_31 = arith.constant 0.000000e+00 : f32
    %67 = vector.broadcast %cst_31 : f32 to vector<8x128xf32>
    %68 = arith.maximumf %66, %67 : vector<8x128xf32>
    %69 = arith.truncf %68 : vector<8x128xf32> to vector<8x128xbf16>
    %c0_32 = arith.constant 0 : index
    %c0_33 = arith.constant 0 : index
    %70 = vector.load %arg10[%c0_32, %c0_33] : memref<128x128xbf16, #tpu.memory_space<vmem>>, vector<128x128xbf16>
    %cst_34 = arith.constant dense<0.000000e+00> : vector<8x128xf32>
    %71 = tpu.matmul %69, %70, %cst_34 {dimension_numbers = #tpu.dot_dimension_numbers<[1], [0], [0], [1], [0, 0, 1, 1], [], []>} : vector<8x128xbf16>, vector<128x128xbf16>, vector<8x128xf32> -> vector<8x128xf32>
    %c0_35 = arith.constant 0 : index
    %c0_36 = arith.constant 0 : index
    %72 = vector.load %arg11[%c0_35, %c0_36] : memref<1x128xf32, #tpu.memory_space<vmem>>, vector<1x128xf32>
    %73 = vector.broadcast %72 : vector<1x128xf32> to vector<8x128xf32>
    %74 = arith.addf %71, %73 : vector<8x128xf32>
    %75 = tpu.iota {dimensions = array<i32: 1>} : vector<8x128xi32>
    %76 = math.tanh %74 : vector<8x128xf32>
    %cst_37 = arith.constant -2.000000e+01 : f32
    %cst_38 = arith.constant 2.000000e+00 : f32
    %77 = vector.broadcast %cst_37 : f32 to vector<8x128xf32>
    %78 = arith.maximumf %77, %74 : vector<8x128xf32>
    %79 = vector.broadcast %cst_38 : f32 to vector<8x128xf32>
    %80 = arith.minimumf %79, %78 : vector<8x128xf32>
    %81 = math.exp %80 : vector<8x128xf32>
    %c64_i32 = arith.constant 64 : i32
    %82 = vector.broadcast %c64_i32 : i32 to vector<8x128xi32>
    %83 = arith.cmpi slt, %75, %82 : vector<8x128xi32>
    %84 = arith.select %83, %76, %81 : vector<8x128xi1>, vector<8x128xf32>
    %c0_39 = arith.constant 0 : index
    %c0_40 = arith.constant 0 : index
    %85 = vector.load %arg12[%c0_39, %c0_40] : memref<8x128xf32, #tpu.memory_space<vmem>>, vector<8x128xf32>
    tpu.vector_store %arg12[%c0_39, %c0_40], %84 {strides = array<i32>} : memref<8x128xf32, #tpu.memory_space<vmem>>, vector<8x128xf32>,
    return
  }
  func.func @transform_0(%arg0: i32) -> (i32, i32) {
    %c0_i32 = arith.constant 0 : i32
    %c0_i32_0 = arith.constant 0 : i32
    return %arg0, %c0_i32 : i32, i32
  }
  func.func @transform_1(%arg0: i32) -> (i32, i32) {
    %c0_i32 = arith.constant 0 : i32
    %c0_i32_0 = arith.constant 0 : i32
    %c0_i32_1 = arith.constant 0 : i32
    return %c0_i32, %c0_i32_0 : i32, i32
  }
  func.func @transform_2(%arg0: i32) -> (i32, i32) {
    %c0_i32 = arith.constant 0 : i32
    %c0_i32_0 = arith.constant 0 : i32
    %c0_i32_1 = arith.constant 0 : i32
    return %c0_i32, %c0_i32_0 : i32, i32
  }
  func.func @transform_3(%arg0: i32) -> (i32, i32) {
    %c0_i32 = arith.constant 0 : i32
    %c0_i32_0 = arith.constant 0 : i32
    %c0_i32_1 = arith.constant 0 : i32
    return %c0_i32, %c0_i32_0 : i32, i32
  }
  func.func @transform_4(%arg0: i32) -> (i32, i32) {
    %c0_i32 = arith.constant 0 : i32
    %c0_i32_0 = arith.constant 0 : i32
    %c0_i32_1 = arith.constant 0 : i32
    return %c0_i32, %c0_i32_0 : i32, i32
  }
  func.func @transform_5(%arg0: i32) -> (i32, i32) {
    %c0_i32 = arith.constant 0 : i32
    %c0_i32_0 = arith.constant 0 : i32
    %c0_i32_1 = arith.constant 0 : i32
    return %c0_i32, %c0_i32_0 : i32, i32
  }
  func.func @transform_6(%arg0: i32) -> (i32, i32) {
    %c0_i32 = arith.constant 0 : i32
    %c0_i32_0 = arith.constant 0 : i32
    %c0_i32_1 = arith.constant 0 : i32
    return %c0_i32, %c0_i32_0 : i32, i32
  }
  func.func @transform_7(%arg0: i32) -> (i32, i32) {
    %c0_i32 = arith.constant 0 : i32
    %c0_i32_0 = arith.constant 0 : i32
    %c0_i32_1 = arith.constant 0 : i32
    return %c0_i32, %c0_i32_0 : i32, i32
  }
  func.func @transform_8(%arg0: i32) -> (i32, i32) {
    %c0_i32 = arith.constant 0 : i32
    %c0_i32_0 = arith.constant 0 : i32
    %c0_i32_1 = arith.constant 0 : i32
    return %c0_i32, %c0_i32_0 : i32, i32
  }
  func.func @transform_9(%arg0: i32) -> (i32, i32) {
    %c0_i32 = arith.constant 0 : i32
    %c0_i32_0 = arith.constant 0 : i32
    %c0_i32_1 = arith.constant 0 : i32
    return %c0_i32, %c0_i32_0 : i32, i32
  }
  func.func @transform_10(%arg0: i32) -> (i32, i32) {
    %c0_i32 = arith.constant 0 : i32
    %c0_i32_0 = arith.constant 0 : i32
    %c0_i32_1 = arith.constant 0 : i32
    return %c0_i32, %c0_i32_0 : i32, i32
  }
  func.func @transform_11(%arg0: i32) -> (i32, i32) {
    %c0_i32 = arith.constant 0 : i32
    %c0_i32_0 = arith.constant 0 : i32
    return %arg0, %c0_i32 : i32, i32
  }
}

</mosaic_0001>

<llo_original>
// kernel: actor_forward.1
$region0: #{actor_forward.1}
  #allocation0 [shape = 'u32[]', space=smem, size = 0x4, offset = 0x4, fixed_abs, tag = 'smem constant byte address 0x4 - core index']
  #allocation1 [shape = 'u32[144,128]{1,0:T(1,128)}', space=vmem, size = 0x12000, scoped, tag = 'internal scratch']
  %s0 = inlined_call_operand.vmem [shape: f32[8,32], index: 0, kind: input, shape index: {}]
  %s1 = inlined_call_operand.vmem [shape: bf16[32,256], index: 1, kind: input, shape index: {}]
  %s2 = inlined_call_operand.vmem [shape: f32[1,256], index: 2, kind: input, shape index: {}]
  %s3 = inlined_call_operand.vmem [shape: f32[1,256], index: 3, kind: input, shape index: {}]
  %s4 = inlined_call_operand.vmem [shape: f32[1,256], index: 4, kind: input, shape index: {}]
  %s5 = inlined_call_operand.hbm [shape: bf16[256,128], index: 5, kind: input, shape index: {}]
  %s6 = inlined_call_operand.vmem [shape: f32[1,128], index: 6, kind: input, shape index: {}]
  %s7 = inlined_call_operand.vmem [shape: f32[1,128], index: 7, kind: input, shape index: {}]
  %s8 = inlined_call_operand.vmem [shape: f32[1,128], index: 8, kind: input, shape index: {}]
  %s9 = inlined_call_operand.hbm [shape: bf16[128,128], index: 9, kind: input, shape index: {}]
  %s10 = inlined_call_operand.hbm [shape: f32[1,128], index: 10, kind: input, shape index: {}]
  %s11 = inlined_call_operand.vmem [shape: f32[8,128], index: 11, kind: output, shape index: {}]
  %s12 = sld [smem:[#allocation0]]
  $region66: #{actor_forward.1} parent=0
    _
  %s14 = ssub.s32 1, %s12
  %s15 = scalar_select 0, %s14, %s12
  $region1: #{actor_forward.1} parent=0
    #allocation2 [shape = 'u8[65536]{0}', space=vmem, size = 0x10000, scoped, tag = 'input window, operand 5, single buffered']
    #allocation3 [shape = 's32[1]{0}', space=sflag, size = 0x4, scoped, tag = 'scoped memory for actor_forward.1']
    #allocation4 [shape = 'u8[32768]{0}', space=vmem, size = 0x8000, scoped, tag = 'input window, operand 9, single buffered']
    #allocation5 [shape = 's32[1]{0}', space=sflag, size = 0x4, scoped, tag = 'scoped memory for actor_forward.1']
    #allocation6 [shape = 'u8[512]{0}', space=vmem, size = 0x400, scoped, tag = 'input window, operand 10, single buffered']
    %16 = vsyncpa [#allocation3], 0
    %17 = vsyncpa [#allocation5], 0
    // Predicated region
    $region2: #{actor_forward.1} parent=1 // pred_check
      _
    $region3: #{actor_forward.1} parent=1 // pred_check_branch
      %19 = sbr.rel (0) target = $region5
    $region4: #{actor_forward.1} parent=1 // pred_region
      _
    $region5: #{actor_forward.1} parent=1 // pred_fallthru
      _
    // Predicated region
    $region6: #{actor_forward.1} parent=1 // pred_check
      _
    $region7: #{actor_forward.1} parent=1 // pred_check_branch
      %21 = sbr.rel (0) target = $region9
    $region8: #{actor_forward.1} parent=1 // pred_region
      _
    $region9: #{actor_forward.1} parent=1 // pred_fallthru
      _
    // Predicated region
    $region10: #{actor_forward.1} parent=1 // pred_check
      _
    $region11: #{actor_forward.1} parent=1 // pred_check_branch
      %23 = sbr.rel (0) target = $region13
    $region12: #{actor_forward.1} parent=1 // pred_region
      _
    $region13: #{actor_forward.1} parent=1 // pred_fallthru
      _
    // Predicated region
    $region14: #{actor_forward.1} parent=1 // pred_check
      _
    $region15: #{actor_forward.1} parent=1 // pred_check_branch
      %25 = sbr.rel (0) target = $region17
    $region16: #{actor_forward.1} parent=1 // pred_region
      _
    $region17: #{actor_forward.1} parent=1 // pred_fallthru
      _
    // Predicated region
    $region18: #{actor_forward.1} parent=1 // pred_check
      _
    $region19: #{actor_forward.1} parent=1 // pred_check_branch
      %27 = sbr.rel (0) target = $region21
    $region20: #{actor_forward.1} parent=1 // pred_region
      _
    $region21: #{actor_forward.1} parent=1 // pred_fallthru
      _
    // Predicated region
    $region22: #{actor_forward.1} parent=1 // pred_check
      _
    $region23: #{actor_forward.1} parent=1 // pred_check_branch
      %29 = sbr.rel (0) target = $region25
    $region24: #{actor_forward.1} parent=1 // pred_region
      %s31 = ssub.s32 2048, 2048
      %32 = vsyncadd [#allocation3], %s31
      %s33 = sshll.u32 [#allocation2], 4
      %s34 = int_to_ptr.vmem [resolvable:$true] %s33
      %39 = dma.hbm_to_vmem [thread:$0]  %s5, 2048, %s34, [#allocation3], 64, 64, 4
    $region25: #{actor_forward.1} parent=1 // pred_fallthru
      _
    // Predicated region
    $region26: #{actor_forward.1} parent=1 // pred_check
      _
    $region27: #{actor_forward.1} parent=1 // pred_check_branch
      %41 = sbr.rel (0) target = $region29
    $region28: #{actor_forward.1} parent=1 // pred_region
      _
    $region29: #{actor_forward.1} parent=1 // pred_fallthru
      _
    // Predicated region
    $region30: #{actor_forward.1} parent=1 // pred_check
      _
    $region31: #{actor_forward.1} parent=1 // pred_check_branch
      %43 = sbr.rel (0) target = $region33
    $region32: #{actor_forward.1} parent=1 // pred_region
      _
    $region33: #{actor_forward.1} parent=1 // pred_fallthru
      _
    // Predicated region
    $region34: #{actor_forward.1} parent=1 // pred_check
      _
    $region35: #{actor_forward.1} parent=1 // pred_check_branch
      %45 = sbr.rel (0) target = $region37
    $region36: #{actor_forward.1} parent=1 // pred_region
      _
    $region37: #{actor_forward.1} parent=1 // pred_fallthru
      _
    // Predicated region
    $region38: #{actor_forward.1} parent=1 // pred_check
      _
    $region39: #{actor_forward.1} parent=1 // pred_check_branch
      %47 = sbr.rel (0) target = $region41
    $region40: #{actor_forward.1} parent=1 // pred_region
      %s49 = ssub.s32 1024, 1024
      %50 = vsyncadd [#allocation5], %s49
      %s51 = sshll.u32 [#allocation4], 4
      %s52 = int_to_ptr.vmem [resolvable:$true] %s51
      %57 = dma.hbm_to_vmem [thread:$0]  %s9, 1024, %s52, [#allocation5], 64, 64, 4
    $region41: #{actor_forward.1} parent=1 // pred_fallthru
      _
    // Predicated region
    $region42: #{actor_forward.1} parent=1 // pred_check
      _
    $region43: #{actor_forward.1} parent=1 // pred_check_branch
      %59 = sbr.rel (0) target = $region45
    $region44: #{actor_forward.1} parent=1 // pred_region
      %s61 = ssub.s32 16, 16
      %62 = vsyncadd [#allocation5], %s61
      %s64 = sshll.u32 [#allocation6], 4
      %s65 = int_to_ptr.vmem [resolvable:$true] %s64
      %67 = dma.hbm_to_vmem [thread:$0]  %s10, 16, %s65, [#allocation5]
    $region45: #{actor_forward.1} parent=1 // pred_fallthru
      _
    // Predicated region
    $region46: #{actor_forward.1} parent=1 // pred_check
      _
    $region47: #{actor_forward.1} parent=1 // pred_check_branch
      %69 = sbr.rel (0) target = $region49
    $region48: #{actor_forward.1} parent=1 // pred_region
      %70 = dma.done [#allocation3], 2048
    $region49: #{actor_forward.1} parent=1 // pred_fallthru
      _
    // Predicated region
    $region50: #{actor_forward.1} parent=1 // pred_check
      _
    $region51: #{actor_forward.1} parent=1 // pred_check_branch
      %72 = sbr.rel (0) target = $region53
    $region52: #{actor_forward.1} parent=1 // pred_region
      %73 = dma.done [#allocation5], 1024
    $region53: #{actor_forward.1} parent=1 // pred_fallthru
      _
    // Predicated region
    $region54: #{actor_forward.1} parent=1 // pred_check
      _
    $region55: #{actor_forward.1} parent=1 // pred_check_branch
      %75 = sbr.rel (0) target = $region57
    $region56: #{actor_forward.1} parent=1 // pred_region
      %76 = dma.done [#allocation5], 16
    $region57: #{actor_forward.1} parent=1 // pred_fallthru
      _
    %v78 = vld [vmem:[%s0] sm:$0xff]
    %v79 = vpack.c.bf16 %v78, %v78
    %v80 = vld [vmem:[%s1] sm:$0xff]
    %v81 = vld [vmem:[%s1 + $0x8] sm:$0xff]
    %v82 = vld [vmem:[%s1 + $0x10] sm:$0xff]
    %v83 = vld [vmem:[%s1 + $0x18] sm:$0xff]
    %v84 = vld [vmem:[%s2] sm:$0x3]
    %v86 = vlaneseq
    %v87 = vshrl.u32 %v86, 7
    %v88 = vsub.s32 0, %v87
    %v89 = vrot.slane %v84, %v88
    %v90 = vlaneseq
    %v91 = vshrl.u32 %v90, 7
    %v92 = vsub.s32 1, %v91
    %v93 = vrot.slane %v84, %v92
    %v100 = vunpack.c.l.b16 %v80
    %v101 = vunpack.c.h.b16 %v80
    %v102 = vunpack.c.l.b16 %v81
    %v103 = vunpack.c.h.b16 %v81
    %v104 = vunpack.c.l.b16 %v82
    %v105 = vunpack.c.h.b16 %v82
    %v106 = vunpack.c.l.b16 %v83
    %v107 = vunpack.c.h.b16 %v83
    %v108 = vpack.c.b16 %v102, %v100
    %v109 = vpack.c.b16 %v103, %v101
    %v110 = vpack.c.b16 %v106, %v104
    %v111 = vpack.c.b16 %v107, %v105
    %vm116 = vcmask 261120
    %v118 = vsel %vm116, %v79, 0
    %120 = vmatprep.subr.bf16.mxu0 %v109
    %121 = vmatpush1.bf16.msra.mxu0 %v108
    %122 = vmatprep.subr.bf16.mxu0 %v111
    %123 = vmatpush1.bf16.msra.mxu0 %v110
    %124 = vmatprep.subr.bf16.mxu0 0
    %125 = vmatpush1.bf16.msra.mxu0 0
    %126 = vmatprep.subr.bf16.mxu0 0
    %127 = vmatpush1.bf16.msra.mxu0 0
    %128 = vmatprep.subr.bf16.mxu0 0
    %129 = vmatpush1.bf16.msra.mxu0 0
    %130 = vmatprep.subr.bf16.mxu0 0
    %131 = vmatpush1.bf16.msra.mxu0 0
    %132 = vmatprep.subr.bf16.mxu0 0
    %133 = vmatpush1.bf16.msra.mxu0 0
    %134 = vmatprep.subr.bf16.mxu0 0
    %135 = vmatpush1.bf16.msra.mxu0 0
    %136 = vmatprep.subr.bf16.mxu0 0
    %137 = vmatpush1.bf16.msra.mxu0 0
    %138 = vmatprep.subr.bf16.mxu0 0
    %139 = vmatpush1.bf16.msra.mxu0 0
    %140 = vmatprep.subr.bf16.mxu0 0
    %141 = vmatpush1.bf16.msra.mxu0 0
    %142 = vmatprep.subr.bf16.mxu0 0
    %143 = vmatpush1.bf16.msra.mxu0 0
    %144 = vmatprep.subr.bf16.mxu0 0
    %145 = vmatpush1.bf16.msra.mxu0 0
    %146 = vmatprep.subr.bf16.mxu0 0
    %147 = vmatpush1.bf16.msra.mxu0 0
    %148 = vmatprep.subr.bf16.mxu0 0
    %149 = vmatpush1.bf16.msra.mxu0 0
    %150 = vmatprep.subr.bf16.mxu0 0
    %151 = vmatpush1.bf16.msra.mxu0 0
    %152 = vmatprep.mubr.bf16.mxu0 0
    %153 = vmatmul.mubr.bf16.gmra.mrb[0].mxu0 %v118
    %v154 = vpop.f32.mrb[0].mxu0
    %v155 = vadd.f32 %v89, %v154
    %v156 = vpop.f32.mrb[0].mxu0
    %v157 = vadd.f32 %v93, %v156
    %v158 = vpop.f32.mrb[0].mxu0
    %v159 = vpop.f32.mrb[0].mxu0
    %160 = vdwg.mxu0
    %v161 = vld [vmem:[%s3] sm:$0x3]
    %v162 = vld [vmem:[%s4] sm:$0x3]
    %v163 = vadd.f32 %v155, %v157
    %164 = vadd.xlane.f32.xlu0 %v163
    %v165 = vpop.xlane.xlu0 %164
    %v166 = vmul.f32 %v155, %v155
    %v167 = vmul.f32 %v157, %v157
    %v168 = vadd.f32 %v166, %v167
    %169 = vadd.xlane.f32.xlu0 %v168
    %v170 = vpop.xlane.xlu0 %169
    %v171 = vmul.f32 %v165, 0.00390625
    %v172 = vmul.f32 %v170, 0.00390625
    %v173 = vmul.f32 %v171, %v171
    %v174 = vsub.f32 %v172, %v173
    %v175 = vmax.f32 %v174, 0.0
    %v176 = vadd.f32 %v175, 1e-05
    %v177 = vrsqrt.pop %v176
    %v178 = vsub.f32 %v155, %v171
    %v179 = vsub.f32 %v157, %v171
    %v180 = vmul.f32 %v178, %v177
    %v181 = vmul.f32 %v179, %v177
    %v183 = vlaneseq
    %v184 = vshrl.u32 %v183, 7
    %v185 = vsub.s32 0, %v184
    %v186 = vrot.slane %v161, %v185
    %v187 = vlaneseq
    %v188 = vshrl.u32 %v187, 7
    %v189 = vsub.s32 1, %v188
    %v190 = vrot.slane %v161, %v189
    %v193 = vmul.f32 %v180, %v186
    %v194 = vmul.f32 %v181, %v190
    %v196 = vlaneseq
    %v197 = vshrl.u32 %v196, 7
    %v198 = vsub.s32 0, %v197
    %v199 = vrot.slane %v162, %v198
    %v200 = vlaneseq
    %v201 = vshrl.u32 %v200, 7
    %v202 = vsub.s32 1, %v201
    %v203 = vrot.slane %v162, %v202
    %v206 = vadd.f32 %v193, %v199
    %v207 = vadd.f32 %v194, %v203
    %v208 = vmax.f32 %v206, 0.0
    %v209 = vmax.f32 %v207, 0.0
    %v210 = vpack.c.bf16 %v208, %v208
    %v211 = vpack.c.bf16 %v209, %v209
    %v212 = vld [vmem:[#allocation2] sm:$0xf]
    %v213 = vld [vmem:[#allocation2 + $0x4] sm:$0xf]
    %v214 = vld [vmem:[#allocation2 + $0x8] sm:$0xf]
    %v215 = vld [vmem:[#allocation2 + $0xc] sm:$0xf]
    %v216 = vld [vmem:[#allocation2 + $0x10] sm:$0xf]
    %v217 = vld [vmem:[#allocation2 + $0x14] sm:$0xf]
    %v218 = vld [vmem:[#allocation2 + $0x18] sm:$0xf]
    %v219 = vld [vmem:[#allocation2 + $0x1c] sm:$0xf]
    %v220 = vld [vmem:[#allocation2 + $0x20] sm:$0xf]
    %v221 = vld [vmem:[#allocation2 + $0x24] sm:$0xf]
    %v222 = vld [vmem:[#allocation2 + $0x28] sm:$0xf]
    %v223 = vld [vmem:[#allocation2 + $0x2c] sm:$0xf]
    %v224 = vld [vmem:[#allocation2 + $0x30] sm:$0xf]
    %v225 = vld [vmem:[#allocation2 + $0x34] sm:$0xf]
    %v226 = vld [vmem:[#allocation2 + $0x38] sm:$0xf]
    %v227 = vld [vmem:[#allocation2 + $0x3c] sm:$0xf]
    %v228 = vld [vmem:[#allocation2 + $0x40] sm:$0xf]
    %v229 = vld [vmem:[#allocation2 + $0x44] sm:$0xf]
    %v230 = vld [vmem:[#allocation2 + $0x48] sm:$0xf]
    %v231 = vld [vmem:[#allocation2 + $0x4c] sm:$0xf]
    %v232 = vld [vmem:[#allocation2 + $0x50] sm:$0xf]
    %v233 = vld [vmem:[#allocation2 + $0x54] sm:$0xf]
    %v234 = vld [vmem:[#allocation2 + $0x58] sm:$0xf]
    %v235 = vld [vmem:[#allocation2 + $0x5c] sm:$0xf]
    %v236 = vld [vmem:[#allocation2 + $0x60] sm:$0xf]
    %v237 = vld [vmem:[#allocation2 + $0x64] sm:$0xf]
    %v238 = vld [vmem:[#allocation2 + $0x68] sm:$0xf]
    %v239 = vld [vmem:[#allocation2 + $0x6c] sm:$0xf]
    %v240 = vld [vmem:[#allocation2 + $0x70] sm:$0xf]
    %v241 = vld [vmem:[#allocation2 + $0x74] sm:$0xf]
    %v242 = vld [vmem:[#allocation2 + $0x78] sm:$0xf]
    %v243 = vld [vmem:[#allocation2 + $0x7c] sm:$0xf]
    %v244 = vld [vmem:[%s6] sm:$0x1]
    %v246 = vlaneseq
    %v247 = vshrl.u32 %v246, 7
    %v248 = vsub.s32 0, %v247
    %v249 = vrot.slane %v244, %v248
    %v283 = vunpack.c.l.b16 %v212
    %v284 = vunpack.c.l.b16 %v213
    %v285 = vunpack.c.l.b16 %v214
    %v286 = vunpack.c.l.b16 %v215
    %v287 = vunpack.c.l.b16 %v216
    %v288 = vunpack.c.l.b16 %v217
    %v289 = vunpack.c.l.b16 %v218
    %v290 = vunpack.c.l.b16 %v219
    %v291 = vunpack.c.l.b16 %v220
    %v292 = vunpack.c.l.b16 %v221
    %v293 = vunpack.c.l.b16 %v222
    %v294 = vunpack.c.l.b16 %v223
    %v295 = vunpack.c.l.b16 %v224
    %v296 = vunpack.c.l.b16 %v225
    %v297 = vunpack.c.l.b16 %v226
    %v298 = vunpack.c.l.b16 %v227
    %v299 = vunpack.c.l.b16 %v228
    %v300 = vunpack.c.l.b16 %v229
    %v301 = vunpack.c.l.b16 %v230
    %v302 = vunpack.c.l.b16 %v231
    %v303 = vunpack.c.l.b16 %v232
    %v304 = vunpack.c.l.b16 %v233
    %v305 = vunpack.c.l.b16 %v234
    %v306 = vunpack.c.l.b16 %v235
    %v307 = vunpack.c.l.b16 %v236
    %v308 = vunpack.c.l.b16 %v237
    %v309 = vunpack.c.l.b16 %v238
    %v310 = vunpack.c.l.b16 %v239
    %v311 = vunpack.c.l.b16 %v240
    %v312 = vunpack.c.l.b16 %v241
    %v313 = vunpack.c.l.b16 %v242
    %v314 = vunpack.c.l.b16 %v243
    %v315 = vpack.c.b16 %v284, %v283
    %v316 = vpack.c.b16 %v286, %v285
    %v317 = vpack.c.b16 %v288, %v287
    %v318 = vpack.c.b16 %v290, %v289
    %v319 = vpack.c.b16 %v292, %v291
    %v320 = vpack.c.b16 %v294, %v293
    %v321 = vpack.c.b16 %v296, %v295
    %v322 = vpack.c.b16 %v298, %v297
    %v323 = vpack.c.b16 %v300, %v299
    %v324 = vpack.c.b16 %v302, %v301
    %v325 = vpack.c.b16 %v304, %v303
    %v326 = vpack.c.b16 %v306, %v305
    %v327 = vpack.c.b16 %v308, %v307
    %v328 = vpack.c.b16 %v310, %v309
    %v329 = vpack.c.b16 %v312, %v311
    %v330 = vpack.c.b16 %v314, %v313
    %347 = vmatprep.subr.bf16.mxu0 0
    %348 = vmatpush1.bf16.msra.mxu0 %v315
    %349 = vmatprep.subr.bf16.mxu0 0
    %350 = vmatpush1.bf16.msra.mxu0 %v316
    %351 = vmatprep.subr.bf16.mxu0 0
    %352 = vmatpush1.bf16.msra.mxu0 %v317
    %353 = vmatprep.subr.bf16.mxu0 0
    %354 = vmatpush1.bf16.msra.mxu0 %v318
    %355 = vmatprep.subr.bf16.mxu0 0
    %356 = vmatpush1.bf16.msra.mxu0 %v319
    %357 = vmatprep.subr.bf16.mxu0 0
    %358 = vmatpush1.bf16.msra.mxu0 %v320
    %359 = vmatprep.subr.bf16.mxu0 0
    %360 = vmatpush1.bf16.msra.mxu0 %v321
    %361 = vmatprep.subr.bf16.mxu0 0
    %362 = vmatpush1.bf16.msra.mxu0 %v322
    %363 = vmatprep.subr.bf16.mxu0 0
    %364 = vmatpush1.bf16.msra.mxu0 %v323
    %365 = vmatprep.subr.bf16.mxu0 0
    %366 = vmatpush1.bf16.msra.mxu0 %v324
    %367 = vmatprep.subr.bf16.mxu0 0
    %368 = vmatpush1.bf16.msra.mxu0 %v325
    %369 = vmatprep.subr.bf16.mxu0 0
    %370 = vmatpush1.bf16.msra.mxu0 %v326
    %371 = vmatprep.subr.bf16.mxu0 0
    %372 = vmatpush1.bf16.msra.mxu0 %v327
    %373 = vmatprep.subr.bf16.mxu0 0
    %374 = vmatpush1.bf16.msra.mxu0 %v328
    %375 = vmatprep.subr.bf16.mxu0 0
    %376 = vmatpush1.bf16.msra.mxu0 %v329
    %377 = vmatprep.subr.bf16.mxu0 0
    %378 = vmatpush1.bf16.msra.mxu0 %v330
    %379 = vmatprep.mubr.bf16.mxu0 %v211
    %380 = vmatmul.mubr.bf16.gmra.mrb[0].mxu0 %v210
    %v381 = vpop.f32.mrb[0].mxu0
    %v382 = vadd.f32 %v249, %v381
    %v383 = vpop.f32.mrb[0].mxu0
    %v384 = vpop.f32.mrb[0].mxu0
    %v385 = vpop.f32.mrb[0].mxu0
    %386 = vdwg.mxu0
    %v387 = vld [vmem:[%s7] sm:$0x1]
    %v388 = vld [vmem:[%s8] sm:$0x1]
    %389 = vadd.xlane.f32.xlu0 %v382
    %v390 = vpop.xlane.xlu0 %389
    %v391 = vmul.f32 %v382, %v382
    %392 = vadd.xlane.f32.xlu0 %v391
    %v393 = vpop.xlane.xlu0 %392
    %v394 = vmul.f32 %v390, 0.0078125
    %v395 = vmul.f32 %v393, 0.0078125
    %v396 = vmul.f32 %v394, %v394
    %v397 = vsub.f32 %v395, %v396
    %v398 = vmax.f32 %v397, 0.0
    %v399 = vadd.f32 %v398, 1e-05
    %v400 = vrsqrt.pop %v399
    %v401 = vsub.f32 %v382, %v394
    %v402 = vmul.f32 %v401, %v400
    %v404 = vlaneseq
    %v405 = vshrl.u32 %v404, 7
    %v406 = vsub.s32 0, %v405
    %v407 = vrot.slane %v387, %v406
    %v409 = vmul.f32 %v402, %v407
    %v411 = vlaneseq
    %v412 = vshrl.u32 %v411, 7
    %v413 = vsub.s32 0, %v412
    %v414 = vrot.slane %v388, %v413
    %v416 = vadd.f32 %v409, %v414
    %v417 = vmax.f32 %v416, 0.0
    %v418 = vpack.c.bf16 %v417, %v417
    %v419 = vld [vmem:[#allocation4] sm:$0xf]
    %v420 = vld [vmem:[#allocation4 + $0x4] sm:$0xf]
    %v421 = vld [vmem:[#allocation4 + $0x8] sm:$0xf]
    %v422 = vld [vmem:[#allocation4 + $0xc] sm:$0xf]
    %v423 = vld [vmem:[#allocation4 + $0x10] sm:$0xf]
    %v424 = vld [vmem:[#allocation4 + $0x14] sm:$0xf]
    %v425 = vld [vmem:[#allocation4 + $0x18] sm:$0xf]
    %v426 = vld [vmem:[#allocation4 + $0x1c] sm:$0xf]
    %v427 = vld [vmem:[#allocation4 + $0x20] sm:$0xf]
    %v428 = vld [vmem:[#allocation4 + $0x24] sm:$0xf]
    %v429 = vld [vmem:[#allocation4 + $0x28] sm:$0xf]
    %v430 = vld [vmem:[#allocation4 + $0x2c] sm:$0xf]
    %v431 = vld [vmem:[#allocation4 + $0x30] sm:$0xf]
    %v432 = vld [vmem:[#allocation4 + $0x34] sm:$0xf]
    %v433 = vld [vmem:[#allocation4 + $0x38] sm:$0xf]
    %v434 = vld [vmem:[#allocation4 + $0x3c] sm:$0xf]
    %v435 = vld [vmem:[#allocation6] sm:$0x1]
    %v437 = vlaneseq
    %v438 = vshrl.u32 %v437, 7
    %v439 = vsub.s32 0, %v438
    %v440 = vrot.slane %v435, %v439
    %v458 = vunpack.c.l.b16 %v419
    %v459 = vunpack.c.l.b16 %v420
    %v460 = vunpack.c.l.b16 %v421
    %v461 = vunpack.c.l.b16 %v422
    %v462 = vunpack.c.l.b16 %v423
    %v463 = vunpack.c.l.b16 %v424
    %v464 = vunpack.c.l.b16 %v425
    %v465 = vunpack.c.l.b16 %v426
    %v466 = vunpack.c.l.b16 %v427
    %v467 = vunpack.c.l.b16 %v428
    %v468 = vunpack.c.l.b16 %v429
    %v469 = vunpack.c.l.b16 %v430
    %v470 = vunpack.c.l.b16 %v431
    %v471 = vunpack.c.l.b16 %v432
    %v472 = vunpack.c.l.b16 %v433
    %v473 = vunpack.c.l.b16 %v434
    %v474 = vpack.c.b16 %v459, %v458
    %v475 = vpack.c.b16 %v461, %v460
    %v476 = vpack.c.b16 %v463, %v462
    %v477 = vpack.c.b16 %v465, %v464
    %v478 = vpack.c.b16 %v467, %v466
    %v479 = vpack.c.b16 %v469, %v468
    %v480 = vpack.c.b16 %v471, %v470
    %v481 = vpack.c.b16 %v473, %v472
    %490 = vmatprep.subr.bf16.mxu0 0
    %491 = vmatpush1.bf16.msra.mxu0 %v474
    %492 = vmatprep.subr.bf16.mxu0 0
    %493 = vmatpush1.bf16.msra.mxu0 %v475
    %494 = vmatprep.subr.bf16.mxu0 0
    %495 = vmatpush1.bf16.msra.mxu0 %v476
    %496 = vmatprep.subr.bf16.mxu0 0
    %497 = vmatpush1.bf16.msra.mxu0 %v477
    %498 = vmatprep.subr.bf16.mxu0 0
    %499 = vmatpush1.bf16.msra.mxu0 %v478
    %500 = vmatprep.subr.bf16.mxu0 0
    %501 = vmatpush1.bf16.msra.mxu0 %v479
    %502 = vmatprep.subr.bf16.mxu0 0
    %503 = vmatpush1.bf16.msra.mxu0 %v480
    %504 = vmatprep.subr.bf16.mxu0 0
    %505 = vmatpush1.bf16.msra.mxu0 %v481
    %506 = vmatprep.subr.bf16.mxu0 0
    %507 = vmatpush1.bf16.msra.mxu0 0
    %508 = vmatprep.subr.bf16.mxu0 0
    %509 = vmatpush1.bf16.msra.mxu0 0
    %510 = vmatprep.subr.bf16.mxu0 0
    %511 = vmatpush1.bf16.msra.mxu0 0
    %512 = vmatprep.subr.bf16.mxu0 0
    %513 = vmatpush1.bf16.msra.mxu0 0
    %514 = vmatprep.subr.bf16.mxu0 0
    %515 = vmatpush1.bf16.msra.mxu0 0
    %516 = vmatprep.subr.bf16.mxu0 0
    %517 = vmatpush1.bf16.msra.mxu0 0
    %518 = vmatprep.subr.bf16.mxu0 0
    %519 = vmatpush1.bf16.msra.mxu0 0
    %520 = vmatprep.subr.bf16.mxu0 0
    %521 = vmatpush1.bf16.msra.mxu0 0
    %522 = vmatprep.mubr.bf16.mxu0 0
    %523 = vmatmul.mubr.bf16.gmra.mrb[0].mxu0 %v418
    %v524 = vpop.f32.mrb[0].mxu0
    %v525 = vadd.f32 %v440, %v524
    %v526 = vpop.f32.mrb[0].mxu0
    %v527 = vpop.f32.mrb[0].mxu0
    %v528 = vpop.f32.mrb[0].mxu0
    %529 = vdwg.mxu0
    %v530 = vlaneseq
    %v531 = vand.u32 %v530, 127
    %v532 = vtanh.pop %v525
    %v533 = vmax.f32 %v525, -20.0
    %v534 = vmin.f32 %v533, 2.0
    %v535 = vmul.f32 %v534, 1.442695
    %v536 = vpow.pop %v535
    %vm537 = vcmp.lt.s32.totalorder %v531, 64
    %v538 = vsel %vm537, %v532, %v536
    %539 = vst [vmem:[%s11] sm:$0xff] %v538
    // Predicated region
    $region58: #{actor_forward.1} parent=1 // pred_check
      _
    $region59: #{actor_forward.1} parent=1 // pred_check_branch
      %541 = sbr.rel (0) target = $region61
    $region60: #{actor_forward.1} parent=1 // pred_region
      _
    $region61: #{actor_forward.1} parent=1 // pred_fallthru
      _
    // Predicated region
    $region62: #{actor_forward.1} parent=1 // pred_check
      _
    $region63: #{actor_forward.1} parent=1 // pred_check_branch
      %543 = sbr.rel (0) target = $region65
    $region64: #{actor_forward.1} parent=1 // pred_region
      _
    $region65: #{actor_forward.1} parent=1 // pred_fallthru
      _
    %544 = vsyncpa [#allocation3], 1
    %545 = vsyncpa [#allocation5], 1

</llo_original>
